<compile_context>
chip_gen: v7x
topology: tpu7x:2x2x1
jax: 0.10.0
libtpu: 0.0.40
codegen_flags: <defaults>
</compile_context>

<pallas_src>
import functools

import jax
import jax.numpy as jnp
from jax.experimental import pallas as pl
from jax.experimental.pallas import tpu as pltpu


_LANE = 128       # vreg lane width / MXU alignment
_SUBLANE = 16     # batch-row rounding valid for both f32 (8) and bf16 (16) sublanes


def _round_up(n, m):
    return ((n + m - 1) // m) * m


def _vmem_capacity_bytes():
    """Per-core VMEM capacity; conservative 64 MiB (v7x) fallback if unqueryable."""
    try:
        return int(pltpu.get_tpu_info().vmem_capacity_bytes)
    except Exception:
        return 64 * 1024 * 1024


# --------------------------------------------------------------------------- #
# Parameter preparation (hoisted out of the per-call wrapper).
# --------------------------------------------------------------------------- #
def prepare_bp_net_params(params, compute_dtype=jnp.bfloat16):
    """Pad weights to 128-lane multiples (in compute_dtype) and stack biases (f32)."""
    depth = len(params)
    dims = [params[0][0].shape[0]] + [w.shape[1] for (w, _) in params]
    pdims = [_round_up(d, _LANE) for d in dims]
    maxd = max(pdims[1:])

    weights = []
    for d, (w, _) in enumerate(params):
        wp = (jnp.zeros((pdims[d], pdims[d + 1]), compute_dtype)
              .at[: w.shape[0], : w.shape[1]].set(w.astype(compute_dtype)))
        weights.append(wp)

    b_all = jnp.zeros((depth, maxd), jnp.float32)
    for d, (_, b) in enumerate(params):
        b_all = b_all.at[d, : b.shape[0]].set(b.astype(jnp.float32))

    return {
        "depth": depth,
        "dims": tuple(dims),
        "pdims": tuple(pdims),
        "weights": tuple(weights),
        "biases": b_all,
        "compute_dtype": compute_dtype,
    }


# --------------------------------------------------------------------------- #
# Kernels.
# --------------------------------------------------------------------------- #
def _fused_mlp_kernel(x_ref, *refs, depth, pdims, compute_dtype):
    """Whole bp_net forward for one batch tile; activations never leave VMEM.

    refs = (w0, ..., w_{depth-1}, b_all, out_ref)
    """
    b_all_ref = refs[depth]
    out_ref = refs[depth + 1]

    h = x_ref[...]                                   # (TB, pdims[0]) compute_dtype
    for d in range(depth):
        w = refs[d][...]                             # (din_p, dout_p) compute_dtype
        dout_p = pdims[d + 1]
        acc = jnp.dot(h.astype(compute_dtype), w,
                      preferred_element_type=jnp.float32)
        acc = acc + b_all_ref[d:d + 1, :dout_p]      # f32 bias row, broadcasts
        if d != depth - 1:
            h = jnp.maximum(acc, 0.0)                # ReLU on hidden layers only
        else:
            out_ref[...] = acc.astype(out_ref.dtype)


def _layer_matmul_kernel(x_ref, w_ref, b_ref, o_ref, acc_ref, *, relu):
    """Streaming fallback: (M, N, K)-tiled Linear (+ optional ReLU), f32 accumulator."""
    k = pl.program_id(2)

    @pl.when(k == 0)
    def _():
        acc_ref[...] = jnp.zeros_like(acc_ref)

    acc_ref[...] += jnp.dot(x_ref[...], w_ref[...],
                            preferred_element_type=jnp.float32)

    @pl.when(k == pl.num_programs(2) - 1)
    def _():
        h = acc_ref[...] + b_ref[...]
        if relu:
            h = jnp.maximum(h, 0.0)
        o_ref[...] = h.astype(o_ref.dtype)


# --------------------------------------------------------------------------- #
# Forward.
# --------------------------------------------------------------------------- #
def bp_net_forward(x, prepared, *, batch_tile=256, force_streamed=False):
    """bp_net.forward: fused single pallas_call when the weight stack fits VMEM,
    otherwise a layer-by-layer K-tiled streaming path (v7x 64 MiB safe)."""
    depth = prepared["depth"]
    dims, pdims = prepared["dims"], prepared["pdims"]
    weights, b_all = prepared["weights"], prepared["biases"]
    compute_dtype = prepared["compute_dtype"]
    cd_bytes = jnp.dtype(compute_dtype).itemsize

    B, in_dim = x.shape
    assert in_dim == dims[0]
    out_dim = dims[-1]
    maxd = max(pdims[1:])

    # ---- batch tile: large tiles amortize the ~0.35us/step overhead; grid >= 2
    # keeps both v7x TensorCores busy and lets the input/output DMA pipeline.
    TB = min(batch_tile, _round_up(B, _SUBLANE))
    if B > _SUBLANE and _round_up(B, TB) // TB < 2:
        TB = _round_up((B + 1) // 2, _SUBLANE)
    B_pad = _round_up(B, TB)
    num_tiles = B_pad // TB

    x_p = (jnp.zeros((B_pad, pdims[0]), compute_dtype)
           .at[:B, :in_dim].set(x.astype(compute_dtype)))

    # ---- VMEM budgeting (per-generation: 75% of queried capacity).
    budget = int(0.75 * _vmem_capacity_bytes())
    weight_bytes = sum(int(w.size) * cd_bytes for w in weights)   # single-buffered
    bias_bytes = int(b_all.size) * 4
    act_bytes = TB * maxd * (4 + cd_bytes)                        # f32 acc + bf16 h
    io_bytes = 2 * TB * pdims[0] * cd_bytes + 2 * TB * pdims[-1] * 4
    fused_footprint = weight_bytes + bias_bytes + act_bytes + io_bytes + (2 << 20)

    use_fused = (not force_streamed) and fused_footprint <= budget

    if use_fused:
        in_specs = [pl.BlockSpec((TB, pdims[0]), lambda i: (i, 0))]
        for d in range(depth):
            # Weights have constant index maps -> resident; single-buffer them.
            in_specs.append(pl.BlockSpec(
                (pdims[d], pdims[d + 1]), lambda i: (0, 0),
                pipeline_mode=pl.Buffered(1)))
        in_specs.append(pl.BlockSpec(
            (depth, maxd), lambda i: (0, 0), pipeline_mode=pl.Buffered(1)))
        out_specs = pl.BlockSpec((TB, pdims[-1]), lambda i: (i, 0))

        flops = sum(2 * B_pad * pdims[d] * pdims[d + 1] for d in range(depth))
        bytes_accessed = (int(x_p.size) * cd_bytes + weight_bytes + bias_bytes
                          + B_pad * pdims[-1] * 4)

        kernel = functools.partial(_fused_mlp_kernel, depth=depth,
                                   pdims=pdims, compute_dtype=compute_dtype)

        out_p = pl.pallas_call(
            kernel,
            out_shape=jax.ShapeDtypeStruct((B_pad, pdims[-1]), jnp.float32),
            grid=(num_tiles,),
            in_specs=in_specs,
            out_specs=out_specs,
            compiler_params=pltpu.CompilerParams(
                dimension_semantics=("parallel",),
                vmem_limit_bytes=max(32 << 20,
                                     min(budget, fused_footprint + (8 << 20))),
            ),
            cost_estimate=pl.CostEstimate(
                flops=flops, transcendentals=0, bytes_accessed=bytes_accessed),
        )(x_p, *weights, b_all)
        return out_p[:B, :out_dim]

    # ---- streaming fallback: one layer per pallas_call, K-tiled MXU matmul with
    # an f32 VMEM accumulator; resident VMEM bounded by one (TK, TN) weight tile.
    h = x_p
    for d in range(depth):
        din_p, dout_p = pdims[d], pdims[d + 1]
        TK = min(din_p, 512)
        TN = min(dout_p, 512)
        last = (d == depth - 1)
        out_dtype = jnp.float32 if last else compute_dtype
        od_bytes = jnp.dtype(out_dtype).itemsize
        bias_d = jax.lax.slice(b_all, (d, 0), (d + 1, dout_p))    # (1, dout_p) f32

        layer_flops = 2 * B_pad * din_p * dout_p
        layer_bytes = (B_pad * din_p * cd_bytes + din_p * dout_p * cd_bytes
                       + dout_p * 4 + B_pad * dout_p * od_bytes)
        layer_footprint = (2 * TB * TK * cd_bytes + 2 * TK * TN * cd_bytes
                           + 2 * TB * TN * od_bytes + TB * TN * 4
                           + 2 * TN * 4 + (2 << 20))

        h = pl.pallas_call(
            functools.partial(_layer_matmul_kernel, relu=not last),
            out_shape=jax.ShapeDtypeStruct((B_pad, dout_p), out_dtype),
            grid=(num_tiles, dout_p // TN, din_p // TK),
            in_specs=[
                pl.BlockSpec((TB, TK), lambda i, j, k: (i, k)),
                pl.BlockSpec((TK, TN), lambda i, j, k: (k, j)),
                pl.BlockSpec((1, TN), lambda i, j, k: (0, j)),
            ],
            out_specs=pl.BlockSpec((TB, TN), lambda i, j, k: (i, j)),
            scratch_shapes=[pltpu.VMEM((TB, TN), jnp.float32)],
            compiler_params=pltpu.CompilerParams(
                dimension_semantics=("parallel", "parallel", "arbitrary"),
                vmem_limit_bytes=max(32 << 20,
                                     min(budget, layer_footprint + (8 << 20))),
            ),
            cost_estimate=pl.CostEstimate(
                flops=layer_flops, transcendentals=0,
                bytes_accessed=layer_bytes),
        )(h, weights[d], bias_d)

    return h[:B, :out_dim]


# --------------------------------------------------------------------------- #
# Init + reference.
# --------------------------------------------------------------------------- #
def init_bp_net_params(key, depth, in_dim, hid_dim, out_dim):
    """Deterministic init matching nn.Linear defaults: U(-1/sqrt(fan_in), +)."""
    dims = [in_dim] + [hid_dim] * (depth - 1) + [out_dim]
    params = []
    for d in range(depth):
        key, kw, kb = jax.random.split(key, 3)
        bound = 1.0 / jnp.sqrt(jnp.float32(dims[d]))
        # Stored as (in, out) so the kernel does x @ W directly.
        w = jax.random.uniform(kw, (dims[d], dims[d + 1]),
                               minval=-bound, maxval=bound, dtype=jnp.float32)
        b = jax.random.uniform(kb, (dims[d + 1],),
                               minval=-bound, maxval=bound, dtype=jnp.float32)
        params.append((w, b))
    return params


def bp_net_forward_ref(x, params):
    """Pure-JAX reference for correctness checking."""
    depth = len(params)
    h = x
    for d, (w, b) in enumerate(params):
        h = h @ w + b
        if d != depth - 1:
            h = jnp.maximum(h, 0.0)
    return h


if __name__ == "__main__":
    key = jax.random.PRNGKey(0)
    key, kx = jax.random.split(key)

    depth, in_dim, hid_dim, out_dim = 3, 32, 32, 16
    batch = 64

    params = init_bp_net_params(key, depth, in_dim, hid_dim, out_dim)
    x = jax.random.normal(kx, (batch, in_dim), dtype=jnp.float32)
    y_ref = bp_net_forward_ref(x, params)

    # 1) f32 validation path: exact vs reference (1e-5).
    prep_f32 = prepare_bp_net_params(params, compute_dtype=jnp.float32)
    y_f32 = bp_net_forward(x, prep_f32, batch_tile=32)
    jax.block_until_ready(y_f32)
    assert y_f32.shape == (batch, out_dim)
    assert jnp.allclose(y_f32, y_ref, atol=1e-5, rtol=1e-5)

    # 2) Default bf16 MXU path (f32 accumulate): looser tolerance.
    prep_bf16 = prepare_bp_net_params(params)          # compute_dtype = bf16
    y_bf16 = bp_net_forward(x, prep_bf16, batch_tile=32)
    jax.block_until_ready(y_bf16)
    assert y_bf16.shape == (batch, out_dim)
    assert jnp.allclose(y_bf16, y_ref, atol=5e-2, rtol=5e-2)

    # 3) Forced streaming fallback (large-model / v7x path): same semantics.
    y_stream = bp_net_forward(x, prep_bf16, batch_tile=32, force_streamed=True)
    jax.block_until_ready(y_stream)
    assert jnp.allclose(y_stream, y_ref, atol=5e-2, rtol=5e-2)

    print("KERNEL_OK")
</pallas_src>

<mosaic_0001>
module attributes {stable_mosaic.version = 11 : i64} {
  func.func @_fused_mlp_kernel(%arg0: i32, %arg1: memref<32x128xf32, #tpu.memory_space<vmem>>, %arg2: memref<128x128xf32, #tpu.memory_space<vmem>>, %arg3: memref<128x128xf32, #tpu.memory_space<vmem>>, %arg4: memref<128x128xf32, #tpu.memory_space<vmem>>, %arg5: memref<3x128xf32, #tpu.memory_space<vmem>>, %arg6: memref<32x128xf32, #tpu.memory_space<vmem>>) attributes {dimension_semantics = [#tpu.dimension_semantics<parallel>], iteration_bounds = array<i64: 2>, scalar_prefetch = 0 : i64, scratch_operands = 0 : i64, tpu.core_type = #tpu.core_type<tc>, window_params = [{transform_indices = @transform_0, window_bounds = array<i64: 32, 128>}, {pipeline_mode = #tpu.pipeline_mode<synchronous>, transform_indices = @transform_1, window_bounds = array<i64: 128, 128>}, {pipeline_mode = #tpu.pipeline_mode<synchronous>, transform_indices = @transform_2, window_bounds = array<i64: 128, 128>}, {pipeline_mode = #tpu.pipeline_mode<synchronous>, transform_indices = @transform_3, window_bounds = array<i64: 128, 128>}, {pipeline_mode = #tpu.pipeline_mode<synchronous>, transform_indices = @transform_4, window_bounds = array<i64: 3, 128>}, {transform_indices = @transform_5, window_bounds = array<i64: 32, 128>}]} {
    %c0 = arith.constant 0 : index
    %c0_0 = arith.constant 0 : index
    %0 = vector.load %arg1[%c0, %c0_0] : memref<32x128xf32, #tpu.memory_space<vmem>>, vector<32x128xf32>
    %c0_1 = arith.constant 0 : index
    %c0_2 = arith.constant 0 : index
    %1 = vector.load %arg2[%c0_1, %c0_2] : memref<128x128xf32, #tpu.memory_space<vmem>>, vector<128x128xf32>
    %cst = arith.constant dense<0.000000e+00> : vector<32x128xf32>
    %2 = tpu.matmul %0, %1, %cst {dimension_numbers = #tpu.dot_dimension_numbers<[1], [0], [0], [1], [0, 0, 1, 1], [], []>} : vector<32x128xf32>, vector<128x128xf32>, vector<32x128xf32> -> vector<32x128xf32>
    %c0_3 = arith.constant 0 : index
    %c0_4 = arith.constant 0 : index
    %3 = vector.load %arg5[%c0_3, %c0_4] : memref<3x128xf32, #tpu.memory_space<vmem>>, vector<1x128xf32>
    %4 = vector.broadcast %3 : vector<1x128xf32> to vector<32x128xf32>
    %5 = arith.addf %2, %4 : vector<32x128xf32>
    %cst_5 = arith.constant 0.000000e+00 : f32
    %6 = vector.broadcast %cst_5 : f32 to vector<32x128xf32>
    %7 = arith.maximumf %5, %6 : vector<32x128xf32>
    %c0_6 = arith.constant 0 : index
    %c0_7 = arith.constant 0 : index
    %8 = vector.load %arg3[%c0_6, %c0_7] : memref<128x128xf32, #tpu.memory_space<vmem>>, vector<128x128xf32>
    %cst_8 = arith.constant dense<0.000000e+00> : vector<32x128xf32>
    %9 = tpu.matmul %7, %8, %cst_8 {dimension_numbers = #tpu.dot_dimension_numbers<[1], [0], [0], [1], [0, 0, 1, 1], [], []>} : vector<32x128xf32>, vector<128x128xf32>, vector<32x128xf32> -> vector<32x128xf32>
    %c1 = arith.constant 1 : index
    %c0_9 = arith.constant 0 : index
    %10 = vector.load %arg5[%c1, %c0_9] : memref<3x128xf32, #tpu.memory_space<vmem>>, vector<1x128xf32>
    %11 = vector.broadcast %10 : vector<1x128xf32> to vector<32x128xf32>
    %12 = arith.addf %9, %11 : vector<32x128xf32>
    %cst_10 = arith.constant 0.000000e+00 : f32
    %13 = vector.broadcast %cst_10 : f32 to vector<32x128xf32>
    %14 = arith.maximumf %12, %13 : vector<32x128xf32>
    %c0_11 = arith.constant 0 : index
    %c0_12 = arith.constant 0 : index
    %15 = vector.load %arg4[%c0_11, %c0_12] : memref<128x128xf32, #tpu.memory_space<vmem>>, vector<128x128xf32>
    %cst_13 = arith.constant dense<0.000000e+00> : vector<32x128xf32>
    %16 = tpu.matmul %14, %15, %cst_13 {dimension_numbers = #tpu.dot_dimension_numbers<[1], [0], [0], [1], [0, 0, 1, 1], [], []>} : vector<32x128xf32>, vector<128x128xf32>, vector<32x128xf32> -> vector<32x128xf32>
    %c2 = arith.constant 2 : index
    %c0_14 = arith.constant 0 : index
    %17 = vector.load %arg5[%c2, %c0_14] : memref<3x128xf32, #tpu.memory_space<vmem>>, vector<1x128xf32>
    %18 = vector.broadcast %17 : vector<1x128xf32> to vector<32x128xf32>
    %19 = arith.addf %16, %18 : vector<32x128xf32>
    %c0_15 = arith.constant 0 : index
    %c0_16 = arith.constant 0 : index
    %20 = vector.load %arg6[%c0_15, %c0_16] : memref<32x128xf32, #tpu.memory_space<vmem>>, vector<32x128xf32>
    tpu.vector_store %arg6[%c0_15, %c0_16], %19 {strides = array<i32>} : memref<32x128xf32, #tpu.memory_space<vmem>>, vector<32x128xf32>,
    return
  }
  func.func @transform_0(%arg0: i32) -> (i32, i32) {
    %c0_i32 = arith.constant 0 : i32
    %c0_i32_0 = arith.constant 0 : i32
    return %arg0, %c0_i32 : i32, i32
  }
  func.func @transform_1(%arg0: i32) -> (i32, i32) {
    %c0_i32 = arith.constant 0 : i32
    %c0_i32_0 = arith.constant 0 : i32
    %c0_i32_1 = arith.constant 0 : i32
    return %c0_i32, %c0_i32_0 : i32, i32
  }
  func.func @transform_2(%arg0: i32) -> (i32, i32) {
    %c0_i32 = arith.constant 0 : i32
    %c0_i32_0 = arith.constant 0 : i32
    %c0_i32_1 = arith.constant 0 : i32
    return %c0_i32, %c0_i32_0 : i32, i32
  }
  func.func @transform_3(%arg0: i32) -> (i32, i32) {
    %c0_i32 = arith.constant 0 : i32
    %c0_i32_0 = arith.constant 0 : i32
    %c0_i32_1 = arith.constant 0 : i32
    return %c0_i32, %c0_i32_0 : i32, i32
  }
  func.func @transform_4(%arg0: i32) -> (i32, i32) {
    %c0_i32 = arith.constant 0 : i32
    %c0_i32_0 = arith.constant 0 : i32
    %c0_i32_1 = arith.constant 0 : i32
    return %c0_i32, %c0_i32_0 : i32, i32
  }
  func.func @transform_5(%arg0: i32) -> (i32, i32) {
    %c0_i32 = arith.constant 0 : i32
    %c0_i32_0 = arith.constant 0 : i32
    return %arg0, %c0_i32 : i32, i32
  }
}

</mosaic_0001>

<llo_original>
// kernel: tpu_custom_call.1
$region0: #{tpu_custom_call.1}
  #allocation0 [shape = 'u32[]', space=smem, size = 0x4, offset = 0x4, fixed_abs, tag = 'smem constant byte address 0x4 - core index']
  #allocation1 [shape = 'u32[144,128]{1,0:T(1,128)}', space=vmem, size = 0x12000, scoped, tag = 'internal scratch']
  %s0 = inlined_call_operand.hbm [shape: f32[64,128], index: 0, kind: input, shape index: {}]
  %s1 = inlined_call_operand.hbm [shape: f32[128,128], index: 1, kind: input, shape index: {}]
  %s2 = inlined_call_operand.hbm [shape: f32[128,128], index: 2, kind: input, shape index: {}]
  %s3 = inlined_call_operand.hbm [shape: f32[128,128], index: 3, kind: input, shape index: {}]
  %s4 = inlined_call_operand.vmem [shape: f32[3,128], index: 4, kind: input, shape index: {}]
  %s5 = inlined_call_operand.hbm [shape: f32[64,128], index: 5, kind: output, shape index: {}]
  %s6 = sld [smem:[#allocation0]]
  $region69: #{tpu_custom_call.1} parent=0
    _
  %s8 = ssub.s32 1, %s6
  %s9 = scalar_select 0, %s8, %s6
  $region1: #{tpu_custom_call.1} parent=0
    #allocation2 [shape = 'u8[32768]{0}', space=vmem, size = 0x8000, scoped, tag = 'input window, operand 0']
    #allocation3 [shape = 's32[2]{0}', space=sflag, size = 0x8, scoped, tag = 'scoped memory for tpu_custom_call.1']
    #allocation4 [shape = 's32[2]{0}', space=sflag, size = 0x8, scoped, tag = 'scoped memory for tpu_custom_call.1']
    #allocation5 [shape = 'u8[65536]{0}', space=vmem, size = 0x10000, scoped, tag = 'input window, operand 1, single buffered']
    #allocation6 [shape = 's32[1]{0}', space=sflag, size = 0x4, scoped, tag = 'scoped memory for tpu_custom_call.1']
    #allocation7 [shape = 'u8[65536]{0}', space=vmem, size = 0x10000, scoped, tag = 'input window, operand 2, single buffered']
    #allocation8 [shape = 'u8[65536]{0}', space=vmem, size = 0x10000, scoped, tag = 'input window, operand 3, single buffered']
    #allocation9 [shape = 's32[1]{0}', space=sflag, size = 0x4, scoped, tag = 'scoped memory for tpu_custom_call.1']
    #allocation10 [shape = 'u8[32768]{0}', space=vmem, size = 0x8000, scoped, tag = 'output window, operand 0']
    %10 = vsyncpa [#allocation3], 0
    %s11 = scalar_lea.sflag [#allocation3], 1
    %12 = vsyncpa %s11, 0
    %13 = vsyncpa [#allocation6], 0
    %14 = vsyncpa [#allocation9], 0
    %15 = vsyncpa [#allocation4], 0
    %s16 = scalar_lea.sflag [#allocation4], 1
    %17 = vsyncpa %s16, 0
    loop: start=0, step=1, limit=4
    $region2: #{tpu_custom_call.1} parent=1 // loop_pre_header
      _
    $region3: #{tpu_custom_call.1} parent=1 // loop_header
      %s19 = sphi 0, %s23
      %p20 = scmp.ge.s32.totalorder %s19, 4
      %s29 = sphi 0, %s31
      %s32 = sphi 0, %s29
      %s33 = sphi 0, %s32
      %s49 = sphi 0, %s33
      %s53 = sphi 0, %s53
      %s55 = sphi 0, %s53
      %s56 = sphi 0, %s55
      %s70 = sphi 0, %s56
      %s74 = sphi 0, %s74
      %s76 = sphi 0, %s74
      %s77 = sphi 0, %s76
      %s91 = sphi 0, %s77
      %s95 = sphi 0, %s95
      %s97 = sphi 0, %s95
      %s98 = sphi 0, %s97
      %s112 = sphi 0, %s98
      %s116 = sphi 0, %s116
      %s118 = sphi 0, %s116
      %s119 = sphi 0, %s118
      %s133 = sphi 0, %s119
      %s139 = sphi 0, %s141
      %s142 = sphi 0, %s139
      %s143 = sphi 0, %s142
      %s159 = sphi 0, %s143
    $region4: #{tpu_custom_call.1} parent=1 // loop_header_branch
      %22 = sbr.rel (%p20) target = $region8
    $region5: #{tpu_custom_call.1} parent=1 // loop_body
      %s24 = ssub.s32 %s19, 1
      %s25 = ssub.s32 %s19, 2
      %s26 = sadd.s32 %s19, 1
      %s27 = ssub.s32 %s19, %s26
      %p28 = scmp.eq.s32.totalorder %s27, 0
      %s30 = sadd.s32 %s29, 1
      %s31 = scalar_select %p28, %s29, %s30
      %p34 = pneg %p28
      %p35 = scmp.eq.s32.totalorder %s19, 1
      %p36 = por %p34, %p35
      %p37 = scmp.ne.s32.totalorder %s29, %s32
      %p38 = scmp.eq.s32.totalorder %s19, 0
      %p39 = por %p37, %p38
      %p40 = scmp.ne.s32.totalorder %s29, %s32
      %p41 = scmp.eq.s32.totalorder %s24, 1
      %p42 = por %p40, %p41
      %p43 = scmp.ne.s32.totalorder %s32, %s33
      %p44 = scmp.eq.s32.totalorder %s24, 0
      %p45 = por %p43, %p44
      %p46 = scmp.ne.s32.totalorder %s32, %s33
      %p47 = scmp.eq.s32.totalorder %s25, 1
      %p48 = por %p46, %p47
      %p50 = scmp.ne.s32.totalorder %s33, %s49
      %p51 = scmp.eq.s32.totalorder %s25, 0
      %p52 = por %p50, %p51
      %s54 = sadd.s32 %s53, 1
      %p57 = scmp.eq.s32.totalorder %s19, 1
      %p58 = scmp.ne.s32.totalorder %s53, %s55
      %p59 = scmp.eq.s32.totalorder %s19, 0
      %p60 = por %p58, %p59
      %p61 = scmp.ne.s32.totalorder %s53, %s55
      %p62 = scmp.eq.s32.totalorder %s24, 1
      %p63 = por %p61, %p62
      %p64 = scmp.ne.s32.totalorder %s55, %s56
      %p65 = scmp.eq.s32.totalorder %s24, 0
      %p66 = por %p64, %p65
      %p67 = scmp.ne.s32.totalorder %s55, %s56
      %p68 = scmp.eq.s32.totalorder %s25, 1
      %p69 = por %p67, %p68
      %p71 = scmp.ne.s32.totalorder %s56, %s70
      %p72 = scmp.eq.s32.totalorder %s25, 0
      %p73 = por %p71, %p72
      %s75 = sadd.s32 %s74, 1
      %p78 = scmp.eq.s32.totalorder %s19, 1
      %p79 = scmp.ne.s32.totalorder %s74, %s76
      %p80 = scmp.eq.s32.totalorder %s19, 0
      %p81 = por %p79, %p80
      %p82 = scmp.ne.s32.totalorder %s74, %s76
      %p83 = scmp.eq.s32.totalorder %s24, 1
      %p84 = por %p82, %p83
      %p85 = scmp.ne.s32.totalorder %s76, %s77
      %p86 = scmp.eq.s32.totalorder %s24, 0
      %p87 = por %p85, %p86
      %p88 = scmp.ne.s32.totalorder %s76, %s77
      %p89 = scmp.eq.s32.totalorder %s25, 1
      %p90 = por %p88, %p89
      %p92 = scmp.ne.s32.totalorder %s77, %s91
      %p93 = scmp.eq.s32.totalorder %s25, 0
      %p94 = por %p92, %p93
      %s96 = sadd.s32 %s95, 1
      %p99 = scmp.eq.s32.totalorder %s19, 1
      %p100 = scmp.ne.s32.totalorder %s95, %s97
      %p101 = scmp.eq.s32.totalorder %s19, 0
      %p102 = por %p100, %p101
      %p103 = scmp.ne.s32.totalorder %s95, %s97
      %p104 = scmp.eq.s32.totalorder %s24, 1
      %p105 = por %p103, %p104
      %p106 = scmp.ne.s32.totalorder %s97, %s98
      %p107 = scmp.eq.s32.totalorder %s24, 0
      %p108 = por %p106, %p107
      %p109 = scmp.ne.s32.totalorder %s97, %s98
      %p110 = scmp.eq.s32.totalorder %s25, 1
      %p111 = por %p109, %p110
      %p113 = scmp.ne.s32.totalorder %s98, %s112
      %p114 = scmp.eq.s32.totalorder %s25, 0
      %p115 = por %p113, %p114
      %s117 = sadd.s32 %s116, 1
      %p120 = scmp.eq.s32.totalorder %s19, 1
      %p121 = scmp.ne.s32.totalorder %s116, %s118
      %p122 = scmp.eq.s32.totalorder %s19, 0
      %p123 = por %p121, %p122
      %p124 = scmp.ne.s32.totalorder %s116, %s118
      %p125 = scmp.eq.s32.totalorder %s24, 1
      %p126 = por %p124, %p125
      %p127 = scmp.ne.s32.totalorder %s118, %s119
      %p128 = scmp.eq.s32.totalorder %s24, 0
      %p129 = por %p127, %p128
      %p130 = scmp.ne.s32.totalorder %s118, %s119
      %p131 = scmp.eq.s32.totalorder %s25, 1
      %p132 = por %p130, %p131
      %p134 = scmp.ne.s32.totalorder %s119, %s133
      %p135 = scmp.eq.s32.totalorder %s25, 0
      %p136 = por %p134, %p135
      %s137 = ssub.s32 %s19, %s26
      %p138 = scmp.eq.s32.totalorder %s137, 0
      %s140 = sadd.s32 %s139, 1
      %s141 = scalar_select %p138, %s139, %s140
      %p144 = pneg %p138
      %p145 = scmp.eq.s32.totalorder %s19, 1
      %p146 = por %p144, %p145
      %p147 = scmp.ne.s32.totalorder %s139, %s142
      %p148 = scmp.eq.s32.totalorder %s19, 0
      %p149 = por %p147, %p148
      %p150 = scmp.ne.s32.totalorder %s139, %s142
      %p151 = scmp.eq.s32.totalorder %s24, 1
      %p152 = por %p150, %p151
      %p153 = scmp.ne.s32.totalorder %s142, %s143
      %p154 = scmp.eq.s32.totalorder %s24, 0
      %p155 = por %p153, %p154
      %p156 = scmp.ne.s32.totalorder %s142, %s143
      %p157 = scmp.eq.s32.totalorder %s25, 1
      %p158 = por %p156, %p157
      %p160 = scmp.ne.s32.totalorder %s143, %s159
      %p161 = scmp.eq.s32.totalorder %s25, 0
      %p162 = por %p160, %p161
      %p163 = scmp.le.s32.totalorder 1, %s19
      %p164 = scmp.lt.s32.totalorder %s19, 3
      %p165 = pnand %p163, %p164
      %p166 = pneg %p165
      // Predicated region
      $region9: #{tpu_custom_call.1} parent=5 // pred_check
        _
      $region10: #{tpu_custom_call.1} parent=5 // pred_check_branch
        %168 = sbr.rel (%p165) target = $region12
      $region11: #{tpu_custom_call.1} parent=5 // pred_region
        %s169 = ssub.s32 %s19, 1
        // Predicated region
        $region13: #{tpu_custom_call.1} parent=11 // pred_check
          %p170 = pneg %p66
        $region14: #{tpu_custom_call.1} parent=11 // pred_check_branch
          %172 = sbr.rel (%p170) target = $region16
        $region15: #{tpu_custom_call.1} parent=11 // pred_region
          %s174 = ssub.s32 2048, 2048
          %175 = vsyncadd [#allocation6], %s174
          %s176 = sshll.u32 [#allocation5], 4
          %s177 = int_to_ptr.vmem [resolvable:$true] %s176
          %182 = dma.hbm_to_vmem [thread:$0]  %s1, 2048, %s177, [#allocation6], 128, 128, 8
        $region16: #{tpu_custom_call.1} parent=11 // pred_fallthru
          _
        // Predicated region
        $region17: #{tpu_custom_call.1} parent=11 // pred_check
          %p183 = pneg %p87
        $region18: #{tpu_custom_call.1} parent=11 // pred_check_branch
          %185 = sbr.rel (%p183) target = $region20
        $region19: #{tpu_custom_call.1} parent=11 // pred_region
          %s187 = ssub.s32 2048, 2048
          %188 = vsyncadd [#allocation6], %s187
          %s189 = sshll.u32 [#allocation7], 4
          %s190 = int_to_ptr.vmem [resolvable:$true] %s189
          %195 = dma.hbm_to_vmem [thread:$0]  %s2, 2048, %s190, [#allocation6], 128, 128, 8
        $region20: #{tpu_custom_call.1} parent=11 // pred_fallthru
          _
        // Predicated region
        $region21: #{tpu_custom_call.1} parent=11 // pred_check
          %p196 = pneg %p108
        $region22: #{tpu_custom_call.1} parent=11 // pred_check_branch
          %198 = sbr.rel (%p196) target = $region24
        $region23: #{tpu_custom_call.1} parent=11 // pred_region
          %s200 = ssub.s32 2048, 2048
          %201 = vsyncadd [#allocation9], %s200
          %s202 = sshll.u32 [#allocation8], 4
          %s203 = int_to_ptr.vmem [resolvable:$true] %s202
          %208 = dma.hbm_to_vmem [thread:$0]  %s3, 2048, %s203, [#allocation9], 128, 128, 8
        $region24: #{tpu_custom_call.1} parent=11 // pred_fallthru
          _
        // Predicated region
        $region25: #{tpu_custom_call.1} parent=11 // pred_check
          %p209 = pneg %p129
        $region26: #{tpu_custom_call.1} parent=11 // pred_check_branch
          %211 = sbr.rel (%p209) target = $region28
        $region27: #{tpu_custom_call.1} parent=11 // pred_region
          _
        $region28: #{tpu_custom_call.1} parent=11 // pred_fallthru
          _
      $region12: #{tpu_custom_call.1} parent=5 // pred_fallthru
        _
      %p212 = scmp.lt.s32.totalorder %s19, 2
      // Predicated region
      $region29: #{tpu_custom_call.1} parent=5 // pred_check
        %p213 = pneg %p212
      $region30: #{tpu_custom_call.1} parent=5 // pred_check_branch
        %215 = sbr.rel (%p213) target = $region32
      $region31: #{tpu_custom_call.1} parent=5 // pred_region
        // Predicated region
        $region33: #{tpu_custom_call.1} parent=31 // pred_check
          %p216 = pneg %p39
        $region34: #{tpu_custom_call.1} parent=31 // pred_check_branch
          %218 = sbr.rel (%p216) target = $region36
        $region35: #{tpu_custom_call.1} parent=31 // pred_region
          %s219 = sand.u32 %s29, 1
          %s220 = scalar_lea.sflag [#allocation3], %s219
          %s221 = sand.u32 %s29, 1
          %s222 = smul.addr %s221, 32
          %s223 = scalar_lea.vmem [#allocation2], %s222
          %s224 = smul.u32 4, %s19
          %s226 = ssub.s32 512, 512
          %227 = vsyncadd %s220, %s226
          %s228 = smul.addr %s224, 128
          %s229 = scalar_lea.hbm %s0, %s228
          %s230 = sshll.u32 %s223, 4
          %s231 = int_to_ptr.vmem [resolvable:$true] %s230
          %236 = dma.hbm_to_vmem [thread:$0]  %s229, 512, %s231, %s220, 128, 128, 8
        $region36: #{tpu_custom_call.1} parent=31 // pred_fallthru
          _
      $region32: #{tpu_custom_call.1} parent=5 // pred_fallthru
        _
      %p237 = scmp.le.s32.totalorder 1, %s19
      %p238 = scmp.lt.s32.totalorder %s19, 3
      %p239 = pnand %p237, %p238
      %p240 = pneg %p239
      // Predicated region
      $region37: #{tpu_custom_call.1} parent=5 // pred_check
        _
      $region38: #{tpu_custom_call.1} parent=5 // pred_check_branch
        %242 = sbr.rel (%p239) target = $region40
      $region39: #{tpu_custom_call.1} parent=5 // pred_region
        %s243 = ssub.s32 %s19, 1
        %s244 = sand.u32 %s32, 1
        %s245 = scalar_lea.sflag [#allocation3], %s244
        %s246 = sand.u32 %s32, 1
        %s247 = smul.addr %s246, 32
        %s248 = scalar_lea.vmem [#allocation2], %s247
        // Predicated region
        $region41: #{tpu_custom_call.1} parent=39 // pred_check
          %p249 = pneg %p45
        $region42: #{tpu_custom_call.1} parent=39 // pred_check_branch
          %251 = sbr.rel (%p249) target = $region44
        $region43: #{tpu_custom_call.1} parent=39 // pred_region
          %252 = dma.done %s245, 512
        $region44: #{tpu_custom_call.1} parent=39 // pred_fallthru
          _
        // Predicated region
        $region45: #{tpu_custom_call.1} parent=39 // pred_check
          %p253 = pneg %p66
        $region46: #{tpu_custom_call.1} parent=39 // pred_check_branch
          %255 = sbr.rel (%p253) target = $region48
        $region47: #{tpu_custom_call.1} parent=39 // pred_region
          %256 = dma.done [#allocation6], 2048
        $region48: #{tpu_custom_call.1} parent=39 // pred_fallthru
          _
        // Predicated region
        $region49: #{tpu_custom_call.1} parent=39 // pred_check
          %p257 = pneg %p87
        $region50: #{tpu_custom_call.1} parent=39 // pred_check_branch
          %259 = sbr.rel (%p257) target = $region52
        $region51: #{tpu_custom_call.1} parent=39 // pred_region
          %260 = dma.done [#allocation6], 2048
        $region52: #{tpu_custom_call.1} parent=39 // pred_fallthru
          _
        // Predicated region
        $region53: #{tpu_custom_call.1} parent=39 // pred_check
          %p261 = pneg %p108
        $region54: #{tpu_custom_call.1} parent=39 // pred_check_branch
          %263 = sbr.rel (%p261) target = $region56
        $region55: #{tpu_custom_call.1} parent=39 // pred_region
          %264 = dma.done [#allocation9], 2048
        $region56: #{tpu_custom_call.1} parent=39 // pred_fallthru
          _
        %s265 = sand.u32 %s32, 1
        %s266 = scalar_lea.sflag [#allocation3], %s265
        %s267 = sand.u32 %s32, 1
        %s268 = smul.addr %s267, 32
        %s269 = scalar_lea.vmem [#allocation2], %s268
        %p270 = pneg %p45
        %p271 = pneg %p42
        %p272 = pneg %p66
        %p273 = pneg %p63
        %p274 = pneg %p87
        %p275 = pneg %p84
        %p276 = pneg %p108
        %p277 = pneg %p105
        %p278 = pneg %p129
        %p279 = pneg %p126
        %p280 = pneg %p155
        %p281 = pneg %p152
        %s282 = sand.u32 %s142, 1
        %s283 = scalar_lea.sflag [#allocation4], %s282
        %s284 = sand.u32 %s142, 1
        %s285 = smul.addr %s284, 32
        %s286 = scalar_lea.vmem [#allocation10], %s285
        %s287 = smul.u32 4, %s24
        %s288 = smul.u32 4, %s24
        %v289 = vld [vmem:[%s248] sm:$0xff]
        %v290 = vld [vmem:[%s248 + $0x8] sm:$0xff]
        %v291 = vld [vmem:[%s248 + $0x10] sm:$0xff]
        %v292 = vld [vmem:[%s248 + $0x18] sm:$0xff]
        %v293 = vld [vmem:[#allocation5] sm:$0xff]
        %v294 = vld [vmem:[#allocation5 + $0x8] sm:$0xff]
        %v295 = vld [vmem:[#allocation5 + $0x10] sm:$0xff]
        %v296 = vld [vmem:[#allocation5 + $0x18] sm:$0xff]
        %v297 = vld [vmem:[#allocation5 + $0x20] sm:$0xff]
        %v298 = vld [vmem:[#allocation5 + $0x28] sm:$0xff]
        %v299 = vld [vmem:[#allocation5 + $0x30] sm:$0xff]
        %v300 = vld [vmem:[#allocation5 + $0x38] sm:$0xff]
        %v301 = vld [vmem:[#allocation5 + $0x40] sm:$0xff]
        %v302 = vld [vmem:[#allocation5 + $0x48] sm:$0xff]
        %v303 = vld [vmem:[#allocation5 + $0x50] sm:$0xff]
        %v304 = vld [vmem:[#allocation5 + $0x58] sm:$0xff]
        %v305 = vld [vmem:[#allocation5 + $0x60] sm:$0xff]
        %v306 = vld [vmem:[#allocation5 + $0x68] sm:$0xff]
        %v307 = vld [vmem:[#allocation5 + $0x70] sm:$0xff]
        %v308 = vld [vmem:[#allocation5 + $0x78] sm:$0xff]
        %v309 = vld [vmem:[%s4] sm:$0x1]
        %v310 = vlaneseq
        %v311 = vshrl.u32 %v310, 7
        %v312 = vsub.s32 0, %v311
        %v313 = vrot.slane %v309, %v312
        %314 = vmatprep.subr.mxu0 0.0
        %315 = vmatpush1.msra.mxu0 %v293
        %316 = vmatprep.subr.mxu0 0.0
        %317 = vmatpush1.msra.mxu0 %v294
        %318 = vmatprep.subr.mxu0 0.0
        %319 = vmatpush1.msra.mxu0 %v295
        %320 = vmatprep.subr.mxu0 0.0
        %321 = vmatpush1.msra.mxu0 %v296
        %322 = vmatprep.subr.mxu0 0.0
        %323 = vmatpush1.msra.mxu0 %v297
        %324 = vmatprep.subr.mxu0 0.0
        %325 = vmatpush1.msra.mxu0 %v298
        %326 = vmatprep.subr.mxu0 0.0
        %327 = vmatpush1.msra.mxu0 %v299
        %328 = vmatprep.subr.mxu0 0.0
        %329 = vmatpush1.msra.mxu0 %v300
        %330 = vmatprep.subr.mxu0 0.0
        %331 = vmatpush1.msra.mxu0 %v301
        %332 = vmatprep.subr.mxu0 0.0
        %333 = vmatpush1.msra.mxu0 %v302
        %334 = vmatprep.subr.mxu0 0.0
        %335 = vmatpush1.msra.mxu0 %v303
        %336 = vmatprep.subr.mxu0 0.0
        %337 = vmatpush1.msra.mxu0 %v304
        %338 = vmatprep.subr.mxu0 0.0
        %339 = vmatpush1.msra.mxu0 %v305
        %340 = vmatprep.subr.mxu0 0.0
        %341 = vmatpush1.msra.mxu0 %v306
        %342 = vmatprep.subr.mxu0 0.0
        %343 = vmatpush1.msra.mxu0 %v307
        %344 = vmatprep.subr.mxu0 0.0
        %345 = vmatpush1.msra.mxu0 %v308
        %346 = vmatprep.subr.mxu0 0.0
        %347 = vmatpush1.msra.mxu0 0.0
        %348 = vmatprep.subr.mxu0 0.0
        %349 = vmatpush1.msra.mxu0 0.0
        %350 = vmatprep.subr.mxu0 0.0
        %351 = vmatpush1.msra.mxu0 0.0
        %352 = vmatprep.subr.mxu0 0.0
        %353 = vmatpush1.msra.mxu0 0.0
        %354 = vmatprep.subr.mxu0 0.0
        %355 = vmatpush1.msra.mxu0 0.0
        %356 = vmatprep.subr.mxu0 0.0
        %357 = vmatpush1.msra.mxu0 0.0
        %358 = vmatprep.subr.mxu0 0.0
        %359 = vmatpush1.msra.mxu0 0.0
        %360 = vmatprep.subr.mxu0 0.0
        %361 = vmatpush1.msra.mxu0 0.0
        %362 = vmatprep.subr.mxu0 0.0
        %363 = vmatpush1.msra.mxu0 0.0
        %364 = vmatprep.subr.mxu0 0.0
        %365 = vmatpush1.msra.mxu0 0.0
        %366 = vmatprep.subr.mxu0 0.0
        %367 = vmatpush1.msra.mxu0 0.0
        %368 = vmatprep.subr.mxu0 0.0
        %369 = vmatpush1.msra.mxu0 0.0
        %370 = vmatprep.subr.mxu0 0.0
        %371 = vmatpush1.msra.mxu0 0.0
        %372 = vmatprep.subr.mxu0 0.0
        %373 = vmatpush1.msra.mxu0 0.0
        %374 = vmatprep.subr.mxu0 0.0
        %375 = vmatpush1.msra.mxu0 0.0
        %376 = vmatprep.subr.mxu0 0.0
        %377 = vmatpush1.msra.mxu0 0.0
        %378 = vmatprep.mubr.f32.mxu0 0.0
        %379 = vmatmul.mubr.f32.gmra.mrb[0].mxu0 %v289
        %v380 = vpop.f32.mrb[0].mxu0
        %v381 = vadd.f32 %v313, %v380
        %v382 = vpop.f32.mrb[0].mxu0
        %383 = vmatprep.mubr.f32.mxu0 0.0
        %384 = vmatmul.mubr.f32.gmra.mrb[0].mxu0 %v290
        %v385 = vpop.f32.mrb[0].mxu0
        %v386 = vadd.f32 %v313, %v385
        %v387 = vpop.f32.mrb[0].mxu0
        %388 = vmatprep.mubr.f32.mxu0 0.0
        %389 = vmatmul.mubr.f32.gmra.mrb[0].mxu0 %v291
        %v390 = vpop.f32.mrb[0].mxu0
        %v391 = vadd.f32 %v313, %v390
        %v392 = vpop.f32.mrb[0].mxu0
        %393 = vmatprep.mubr.f32.mxu0 0.0
        %394 = vmatmul.mubr.f32.gmra.mrb[0].mxu0 %v292
        %v395 = vpop.f32.mrb[0].mxu0
        %v396 = vadd.f32 %v313, %v395
        %v397 = vpop.f32.mrb[0].mxu0
        %398 = vdwg.mxu0
        %v399 = vmax.f32 %v381, 0.0
        %v400 = vmax.f32 %v386, 0.0
        %v401 = vmax.f32 %v391, 0.0
        %v402 = vmax.f32 %v396, 0.0
        %v403 = vld [vmem:[#allocation7] sm:$0xff]
        %v404 = vld [vmem:[#allocation7 + $0x8] sm:$0xff]
        %v405 = vld [vmem:[#allocation7 + $0x10] sm:$0xff]
        %v406 = vld [vmem:[#allocation7 + $0x18] sm:$0xff]
        %v407 = vld [vmem:[#allocation7 + $0x20] sm:$0xff]
        %v408 = vld [vmem:[#allocation7 + $0x28] sm:$0xff]
        %v409 = vld [vmem:[#allocation7 + $0x30] sm:$0xff]
        %v410 = vld [vmem:[#allocation7 + $0x38] sm:$0xff]
        %v411 = vld [vmem:[#allocation7 + $0x40] sm:$0xff]
        %v412 = vld [vmem:[#allocation7 + $0x48] sm:$0xff]
        %v413 = vld [vmem:[#allocation7 + $0x50] sm:$0xff]
        %v414 = vld [vmem:[#allocation7 + $0x58] sm:$0xff]
        %v415 = vld [vmem:[#allocation7 + $0x60] sm:$0xff]
        %v416 = vld [vmem:[#allocation7 + $0x68] sm:$0xff]
        %v417 = vld [vmem:[#allocation7 + $0x70] sm:$0xff]
        %v418 = vld [vmem:[#allocation7 + $0x78] sm:$0xff]
        %v419 = vld [vmem:[%s4 + $0x1] sm:$0x1]
        %v420 = vlaneseq
        %v421 = vshrl.u32 %v420, 7
        %v422 = vsub.s32 0, %v421
        %v423 = vrot.slane %v419, %v422
        %424 = vmatprep.subr.mxu0 0.0
        %425 = vmatpush1.msra.mxu0 %v403
        %426 = vmatprep.subr.mxu0 0.0
        %427 = vmatpush1.msra.mxu0 %v404
        %428 = vmatprep.subr.mxu0 0.0
        %429 = vmatpush1.msra.mxu0 %v405
        %430 = vmatprep.subr.mxu0 0.0
        %431 = vmatpush1.msra.mxu0 %v406
        %432 = vmatprep.subr.mxu0 0.0
        %433 = vmatpush1.msra.mxu0 %v407
        %434 = vmatprep.subr.mxu0 0.0
        %435 = vmatpush1.msra.mxu0 %v408
        %436 = vmatprep.subr.mxu0 0.0
        %437 = vmatpush1.msra.mxu0 %v409
        %438 = vmatprep.subr.mxu0 0.0
        %439 = vmatpush1.msra.mxu0 %v410
        %440 = vmatprep.subr.mxu0 0.0
        %441 = vmatpush1.msra.mxu0 %v411
        %442 = vmatprep.subr.mxu0 0.0
        %443 = vmatpush1.msra.mxu0 %v412
        %444 = vmatprep.subr.mxu0 0.0
        %445 = vmatpush1.msra.mxu0 %v413
        %446 = vmatprep.subr.mxu0 0.0
        %447 = vmatpush1.msra.mxu0 %v414
        %448 = vmatprep.subr.mxu0 0.0
        %449 = vmatpush1.msra.mxu0 %v415
        %450 = vmatprep.subr.mxu0 0.0
        %451 = vmatpush1.msra.mxu0 %v416
        %452 = vmatprep.subr.mxu0 0.0
        %453 = vmatpush1.msra.mxu0 %v417
        %454 = vmatprep.subr.mxu0 0.0
        %455 = vmatpush1.msra.mxu0 %v418
        %456 = vmatprep.subr.mxu0 0.0
        %457 = vmatpush1.msra.mxu0 0.0
        %458 = vmatprep.subr.mxu0 0.0
        %459 = vmatpush1.msra.mxu0 0.0
        %460 = vmatprep.subr.mxu0 0.0
        %461 = vmatpush1.msra.mxu0 0.0
        %462 = vmatprep.subr.mxu0 0.0
        %463 = vmatpush1.msra.mxu0 0.0
        %464 = vmatprep.subr.mxu0 0.0
        %465 = vmatpush1.msra.mxu0 0.0
        %466 = vmatprep.subr.mxu0 0.0
        %467 = vmatpush1.msra.mxu0 0.0
        %468 = vmatprep.subr.mxu0 0.0
        %469 = vmatpush1.msra.mxu0 0.0
        %470 = vmatprep.subr.mxu0 0.0
        %471 = vmatpush1.msra.mxu0 0.0
        %472 = vmatprep.subr.mxu0 0.0
        %473 = vmatpush1.msra.mxu0 0.0
        %474 = vmatprep.subr.mxu0 0.0
        %475 = vmatpush1.msra.mxu0 0.0
        %476 = vmatprep.subr.mxu0 0.0
        %477 = vmatpush1.msra.mxu0 0.0
        %478 = vmatprep.subr.mxu0 0.0
        %479 = vmatpush1.msra.mxu0 0.0
        %480 = vmatprep.subr.mxu0 0.0
        %481 = vmatpush1.msra.mxu0 0.0
        %482 = vmatprep.subr.mxu0 0.0
        %483 = vmatpush1.msra.mxu0 0.0
        %484 = vmatprep.subr.mxu0 0.0
        %485 = vmatpush1.msra.mxu0 0.0
        %486 = vmatprep.subr.mxu0 0.0
        %487 = vmatpush1.msra.mxu0 0.0
        %488 = vmatprep.mubr.f32.mxu0 0.0
        %489 = vmatmul.mubr.f32.gmra.mrb[0].mxu0 %v399
        %v490 = vpop.f32.mrb[0].mxu0
        %v491 = vadd.f32 %v423, %v490
        %v492 = vpop.f32.mrb[0].mxu0
        %493 = vmatprep.mubr.f32.mxu0 0.0
        %494 = vmatmul.mubr.f32.gmra.mrb[0].mxu0 %v400
        %v495 = vpop.f32.mrb[0].mxu0
        %v496 = vadd.f32 %v423, %v495
        %v497 = vpop.f32.mrb[0].mxu0
        %498 = vmatprep.mubr.f32.mxu0 0.0
        %499 = vmatmul.mubr.f32.gmra.mrb[0].mxu0 %v401
        %v500 = vpop.f32.mrb[0].mxu0
        %v501 = vadd.f32 %v423, %v500
        %v502 = vpop.f32.mrb[0].mxu0
        %503 = vmatprep.mubr.f32.mxu0 0.0
        %504 = vmatmul.mubr.f32.gmra.mrb[0].mxu0 %v402
        %v505 = vpop.f32.mrb[0].mxu0
        %v506 = vadd.f32 %v423, %v505
        %v507 = vpop.f32.mrb[0].mxu0
        %508 = vdwg.mxu0
        %v509 = vmax.f32 %v491, 0.0
        %v510 = vmax.f32 %v496, 0.0
        %v511 = vmax.f32 %v501, 0.0
        %v512 = vmax.f32 %v506, 0.0
        %v513 = vld [vmem:[#allocation8] sm:$0xff]
        %v514 = vld [vmem:[#allocation8 + $0x8] sm:$0xff]
        %v515 = vld [vmem:[#allocation8 + $0x10] sm:$0xff]
        %v516 = vld [vmem:[#allocation8 + $0x18] sm:$0xff]
        %v517 = vld [vmem:[#allocation8 + $0x20] sm:$0xff]
        %v518 = vld [vmem:[#allocation8 + $0x28] sm:$0xff]
        %v519 = vld [vmem:[#allocation8 + $0x30] sm:$0xff]
        %v520 = vld [vmem:[#allocation8 + $0x38] sm:$0xff]
        %v521 = vld [vmem:[#allocation8 + $0x40] sm:$0xff]
        %v522 = vld [vmem:[#allocation8 + $0x48] sm:$0xff]
        %v523 = vld [vmem:[#allocation8 + $0x50] sm:$0xff]
        %v524 = vld [vmem:[#allocation8 + $0x58] sm:$0xff]
        %v525 = vld [vmem:[#allocation8 + $0x60] sm:$0xff]
        %v526 = vld [vmem:[#allocation8 + $0x68] sm:$0xff]
        %v527 = vld [vmem:[#allocation8 + $0x70] sm:$0xff]
        %v528 = vld [vmem:[#allocation8 + $0x78] sm:$0xff]
        %v529 = vld [vmem:[%s4 + $0x2] sm:$0x1]
        %v530 = vlaneseq
        %v531 = vshrl.u32 %v530, 7
        %v532 = vsub.s32 0, %v531
        %v533 = vrot.slane %v529, %v532
        %534 = vmatprep.subr.mxu0 0.0
        %535 = vmatpush1.msra.mxu0 %v513
        %536 = vmatprep.subr.mxu0 0.0
        %537 = vmatpush1.msra.mxu0 %v514
        %538 = vmatprep.subr.mxu0 0.0
        %539 = vmatpush1.msra.mxu0 %v515
        %540 = vmatprep.subr.mxu0 0.0
        %541 = vmatpush1.msra.mxu0 %v516
        %542 = vmatprep.subr.mxu0 0.0
        %543 = vmatpush1.msra.mxu0 %v517
        %544 = vmatprep.subr.mxu0 0.0
        %545 = vmatpush1.msra.mxu0 %v518
        %546 = vmatprep.subr.mxu0 0.0
        %547 = vmatpush1.msra.mxu0 %v519
        %548 = vmatprep.subr.mxu0 0.0
        %549 = vmatpush1.msra.mxu0 %v520
        %550 = vmatprep.subr.mxu0 0.0
        %551 = vmatpush1.msra.mxu0 %v521
        %552 = vmatprep.subr.mxu0 0.0
        %553 = vmatpush1.msra.mxu0 %v522
        %554 = vmatprep.subr.mxu0 0.0
        %555 = vmatpush1.msra.mxu0 %v523
        %556 = vmatprep.subr.mxu0 0.0
        %557 = vmatpush1.msra.mxu0 %v524
        %558 = vmatprep.subr.mxu0 0.0
        %559 = vmatpush1.msra.mxu0 %v525
        %560 = vmatprep.subr.mxu0 0.0
        %561 = vmatpush1.msra.mxu0 %v526
        %562 = vmatprep.subr.mxu0 0.0
        %563 = vmatpush1.msra.mxu0 %v527
        %564 = vmatprep.subr.mxu0 0.0
        %565 = vmatpush1.msra.mxu0 %v528
        %566 = vmatprep.subr.mxu0 0.0
        %567 = vmatpush1.msra.mxu0 0.0
        %568 = vmatprep.subr.mxu0 0.0
        %569 = vmatpush1.msra.mxu0 0.0
        %570 = vmatprep.subr.mxu0 0.0
        %571 = vmatpush1.msra.mxu0 0.0
        %572 = vmatprep.subr.mxu0 0.0
        %573 = vmatpush1.msra.mxu0 0.0
        %574 = vmatprep.subr.mxu0 0.0
        %575 = vmatpush1.msra.mxu0 0.0
        %576 = vmatprep.subr.mxu0 0.0
        %577 = vmatpush1.msra.mxu0 0.0
        %578 = vmatprep.subr.mxu0 0.0
        %579 = vmatpush1.msra.mxu0 0.0
        %580 = vmatprep.subr.mxu0 0.0
        %581 = vmatpush1.msra.mxu0 0.0
        %582 = vmatprep.subr.mxu0 0.0
        %583 = vmatpush1.msra.mxu0 0.0
        %584 = vmatprep.subr.mxu0 0.0
        %585 = vmatpush1.msra.mxu0 0.0
        %586 = vmatprep.subr.mxu0 0.0
        %587 = vmatpush1.msra.mxu0 0.0
        %588 = vmatprep.subr.mxu0 0.0
        %589 = vmatpush1.msra.mxu0 0.0
        %590 = vmatprep.subr.mxu0 0.0
        %591 = vmatpush1.msra.mxu0 0.0
        %592 = vmatprep.subr.mxu0 0.0
        %593 = vmatpush1.msra.mxu0 0.0
        %594 = vmatprep.subr.mxu0 0.0
        %595 = vmatpush1.msra.mxu0 0.0
        %596 = vmatprep.subr.mxu0 0.0
        %597 = vmatpush1.msra.mxu0 0.0
        %598 = vmatprep.mubr.f32.mxu0 0.0
        %599 = vmatmul.mubr.f32.gmra.mrb[0].mxu0 %v509
        %v600 = vpop.f32.mrb[0].mxu0
        %v601 = vadd.f32 %v533, %v600
        %v602 = vpop.f32.mrb[0].mxu0
        %603 = vmatprep.mubr.f32.mxu0 0.0
        %604 = vmatmul.mubr.f32.gmra.mrb[0].mxu0 %v510
        %v605 = vpop.f32.mrb[0].mxu0
        %v606 = vadd.f32 %v533, %v605
        %v607 = vpop.f32.mrb[0].mxu0
        %608 = vmatprep.mubr.f32.mxu0 0.0
        %609 = vmatmul.mubr.f32.gmra.mrb[0].mxu0 %v511
        %v610 = vpop.f32.mrb[0].mxu0
        %v611 = vadd.f32 %v533, %v610
        %v612 = vpop.f32.mrb[0].mxu0
        %613 = vmatprep.mubr.f32.mxu0 0.0
        %614 = vmatmul.mubr.f32.gmra.mrb[0].mxu0 %v512
        %v615 = vpop.f32.mrb[0].mxu0
        %v616 = vadd.f32 %v533, %v615
        %v617 = vpop.f32.mrb[0].mxu0
        %618 = vdwg.mxu0
        %619 = vst [vmem:[%s286] sm:$0xff] %v601
        %620 = vst [vmem:[%s286 + $0x8] sm:$0xff] %v606
        %621 = vst [vmem:[%s286 + $0x10] sm:$0xff] %v611
        %622 = vst [vmem:[%s286 + $0x18] sm:$0xff] %v616
        %s623 = sand.u32 %s142, 1
        %s624 = scalar_lea.sflag [#allocation4], %s623
        %s625 = sand.u32 %s142, 1
        %s626 = smul.addr %s625, 32
        %s627 = scalar_lea.vmem [#allocation10], %s626
        // Predicated region
        $region57: #{tpu_custom_call.1} parent=39 // pred_check
          %p628 = pneg %p152
        $region58: #{tpu_custom_call.1} parent=39 // pred_check_branch
          %630 = sbr.rel (%p628) target = $region60
        $region59: #{tpu_custom_call.1} parent=39 // pred_region
          %s631 = smul.u32 4, %s24
          %s633 = ssub.s32 512, 512
          %634 = vsyncadd %s624, %s633
          %s635 = smul.addr %s631, 128
          %s636 = scalar_lea.hbm %s5, %s635
          %s637 = sshll.u32 %s627, 4
          %s638 = int_to_ptr.vmem [resolvable:$true] %s637
          %643 = dma.vmem_to_hbm [thread:$0]  %s638, 512, %s636, %s624, 128, 128, 8
        $region60: #{tpu_custom_call.1} parent=39 // pred_fallthru
          _
      $region40: #{tpu_custom_call.1} parent=5 // pred_fallthru
        _
      %p644 = scmp.le.s32.totalorder 2, %s19
      // Predicated region
      $region61: #{tpu_custom_call.1} parent=5 // pred_check
        %p645 = pneg %p644
      $region62: #{tpu_custom_call.1} parent=5 // pred_check_branch
        %647 = sbr.rel (%p645) target = $region64
      $region63: #{tpu_custom_call.1} parent=5 // pred_region
        %s648 = ssub.s32 %s19, 2
        // Predicated region
        $region65: #{tpu_custom_call.1} parent=63 // pred_check
          %p649 = pneg %p158
        $region66: #{tpu_custom_call.1} parent=63 // pred_check_branch
          %651 = sbr.rel (%p649) target = $region68
        $region67: #{tpu_custom_call.1} parent=63 // pred_region
          %s652 = sand.u32 %s143, 1
          %s653 = scalar_lea.sflag [#allocation4], %s652
          %s654 = sand.u32 %s143, 1
          %s655 = smul.addr %s654, 32
          %s656 = scalar_lea.vmem [#allocation10], %s655
          %657 = dma.done %s653, 512
        $region68: #{tpu_custom_call.1} parent=63 // pred_fallthru
          _
      $region64: #{tpu_custom_call.1} parent=5 // pred_fallthru
        _
    $region6: #{tpu_custom_call.1} parent=1 // loop_footer
      %s23 = sadd.s32 1, %s19
    $region7: #{tpu_custom_call.1} parent=1 // loop_footer_branch
      %18 = sbr.rel target = $region3
    $region8: #{tpu_custom_call.1} parent=1 // loop_exit
      _
    %658 = vsyncpa [#allocation3], 1
    %s659 = scalar_lea.sflag [#allocation3], 1
    %660 = vsyncpa %s659, 1
    %661 = vsyncpa [#allocation6], 1
    %662 = vsyncpa [#allocation9], 1
    %663 = vsyncpa [#allocation4], 1
    %s664 = scalar_lea.sflag [#allocation4], 1
    %665 = vsyncpa %s664, 1

</llo_original>
